<compile_context>
chip_gen: v5e
topology: v5e:2x2
jax: 0.10.0
libtpu: 0.0.40
codegen_flags: <defaults>
</compile_context>

<pallas_src>
import functools

import jax
import jax.numpy as jnp
from jax.experimental import pallas as pl
from jax.experimental.pallas import tpu as pltpu


# ----------------------------------------------------------------------------
# Helpers
# ----------------------------------------------------------------------------
def _round_up(v, m):
    return ((v + m - 1) // m) * m


def _pad2(x, rows, cols):
    r, c = x.shape
    return jnp.pad(x, ((0, rows - r), (0, cols - c)))


# Generation-aware VMEM budgeting (v5e/v6e: 128 MiB, v7x: 64 MiB physical).
try:
    _VMEM_CAPACITY = int(getattr(pltpu.get_tpu_info(), "vmem_capacity_bytes",
                                 64 * 1024 * 1024))
except Exception:  # pragma: no cover - conservative fallback
    _VMEM_CAPACITY = 64 * 1024 * 1024
_VMEM_LIMIT = min((_VMEM_CAPACITY * 3) // 4, 96 * 1024 * 1024)
_VMEM_BUDGET = _VMEM_LIMIT // 2  # working-set budget used for tile selection

_COMPILER_PARAMS = pltpu.CompilerParams(
    dimension_semantics=("parallel", "arbitrary"),  # rows across TCs, K serial
    vmem_limit_bytes=_VMEM_LIMIT,
)


def _pick_tiles(n_pad, f_pad, out_bytes):
    """Pick (row tile, K tile) that fit the per-generation VMEM budget."""
    row_cands = [t for t in (1024, 512, 256, 128) if n_pad % t == 0]
    if not row_cands:
        row_cands = [n_pad]
    tm = None
    for t in row_cands:
        if n_pad // t >= 8:          # enough steps for megacore + pipelining
            tm = t
            break
    if tm is None:
        tm = row_cands[-1]           # smallest candidate -> most grid steps

    k_cands = [t for t in (4096, 2048, 1024, 512, 256, 128) if n_pad % t == 0]
    if not k_cands:
        k_cands = [n_pad]
    tk = k_cands[-1]
    for t in k_cands:
        usage = (2 * tm * t * 2          # A tile, double-buffered, bf16
                 + 2 * t * f_pad * 2     # M tile, double-buffered, bf16
                 + 2 * tm * f_pad * out_bytes   # output block buffers
                 + tm * f_pad * 4        # f32 accumulator scratch
                 + 2 * f_pad * 4)        # bias
        if usage <= _VMEM_BUDGET:
            tk = t
            break
    return tm, tk


# ----------------------------------------------------------------------------
# Kernel: one GCN aggregation layer on a (row, K) tile of A
#   out_row_tile = act( sum_k A[row_tile, k_tile] @ M[k_tile, :] + b )
# where M is the pre-multiplied (X @ W) operand (weight matmul hoisted out).
# ----------------------------------------------------------------------------
def _agg_bias_kernel(a_ref, m_ref, b_ref, o_ref, acc_ref, *, relu):
    @pl.when(pl.program_id(1) == 0)
    def _init():
        acc_ref[...] = jnp.zeros_like(acc_ref)

    acc_ref[...] += jnp.dot(a_ref[...], m_ref[...],
                            preferred_element_type=jnp.float32)

    @pl.when(pl.program_id(1) == pl.num_programs(1) - 1)
    def _finalize():
        r = acc_ref[...] + b_ref[...]
        if relu:
            r = jnp.maximum(r, 0.0)
        o_ref[...] = r.astype(o_ref.dtype)


def _gcn_aggregate(a_p, m_p, b_p, *, relu, out_dtype):
    """a_p: [n_pad, n_pad] bf16, m_p: [n_pad, f_pad] bf16, b_p: [1, f_pad] f32."""
    n_pad = a_p.shape[0]
    f_pad = m_p.shape[1]
    out_bytes = jnp.dtype(out_dtype).itemsize
    tm, tk = _pick_tiles(n_pad, f_pad, out_bytes)

    kernel = functools.partial(_agg_bias_kernel, relu=relu)
    return pl.pallas_call(
        kernel,
        out_shape=jax.ShapeDtypeStruct((n_pad, f_pad), out_dtype),
        grid_spec=pltpu.PrefetchScalarGridSpec(
            num_scalar_prefetch=0,
            grid=(n_pad // tm, n_pad // tk),
            in_specs=[
                pl.BlockSpec((tm, tk), lambda i, k: (i, k)),      # A tile
                pl.BlockSpec((tk, f_pad), lambda i, k: (k, 0)),   # (X @ W) tile
                pl.BlockSpec((1, f_pad), lambda i, k: (0, 0)),    # bias
            ],
            out_specs=pl.BlockSpec((tm, f_pad), lambda i, k: (i, 0)),
            scratch_shapes=[pltpu.VMEM((tm, f_pad), jnp.float32)],
        ),
        compiler_params=_COMPILER_PARAMS,
    )(a_p, m_p, b_p)


# ----------------------------------------------------------------------------
# Glue: normalized adjacency, params, forward
# ----------------------------------------------------------------------------
def build_norm_adj(edge_index, num_nodes, *, symmetrize=True):
    """Dense D^-1/2 (A + I) D^-1/2 from edge_index [2, E] (int32).

    Matches PyG gcn_norm semantics for unweighted graphs: edges de-duplicated,
    self loops added only where missing (existing self loops keep weight 1).
    """
    src, dst = edge_index[0], edge_index[1]
    a = jnp.zeros((num_nodes, num_nodes), jnp.float32)
    a = a.at[src, dst].add(1.0)
    if symmetrize:
        a = a.at[dst, src].add(1.0)
    a = jnp.minimum(a, 1.0)                                     # de-duplicate
    a = jnp.maximum(a, jnp.eye(num_nodes, dtype=jnp.float32))   # remaining self loops
    deg = a.sum(axis=1)
    d_inv_sqrt = 1.0 / jnp.sqrt(deg)                            # deg >= 1
    return a * d_inv_sqrt[:, None] * d_inv_sqrt[None, :]


def glorot(key, fan_in, fan_out):
    limit = jnp.sqrt(6.0 / (fan_in + fan_out))
    return jax.random.uniform(key, (fan_in, fan_out), jnp.float32, -limit, limit)


def init_vgcn_params(key, input_dim, hidden_dim, latent_dim):
    k1, k2, k3 = jax.random.split(key, 3)
    return {
        "w1": glorot(k1, input_dim, hidden_dim),
        "b1": jnp.zeros((1, hidden_dim), jnp.float32),
        "w_mu": glorot(k2, hidden_dim, latent_dim),
        "b_mu": jnp.zeros((1, latent_dim), jnp.float32),
        "w_logstd": glorot(k3, hidden_dim, latent_dim),
        "b_logstd": jnp.zeros((1, latent_dim), jnp.float32),
    }


@jax.jit
def vgcn_encoder_forward(params, x, a_hat):
    """forward(x, edge_index) -> (mu, logstd). a_hat plays the cached-norm role."""
    n = x.shape[0]
    hidden = params["w1"].shape[1]
    latent = params["w_mu"].shape[1]

    n_pad = _round_up(max(n, 8), 128)
    h_pad = _round_up(hidden, 128)
    head_pad = _round_up(2 * latent, 128)

    # Pad + bf16-cast the adjacency ONCE; shared by both pallas_calls.
    a_p = _pad2(a_hat, n_pad, n_pad).astype(jnp.bfloat16)

    # ---- Layer 1: hoist X @ W1 out of the per-tile loop. ----
    xw1 = jnp.dot(x, params["w1"], preferred_element_type=jnp.float32)
    xw1_p = _pad2(xw1, n_pad, h_pad).astype(jnp.bfloat16)
    b1_p = _pad2(params["b1"], 1, h_pad).astype(jnp.float32)
    # h stays in padded bf16 layout and feeds the head call directly.
    # (Padded rows of h hold relu(b1) garbage; harmless because A_hat's padded
    #  columns are zero and padded output rows are sliced off.)
    h_p = _gcn_aggregate(a_p, xw1_p, b1_p, relu=True, out_dtype=jnp.bfloat16)

    # ---- Heads: pack W_mu / W_logstd into one RHS, hoist h @ W_cat. ----
    w_cat = jnp.concatenate([params["w_mu"], params["w_logstd"]], axis=1)
    b_cat = jnp.concatenate([params["b_mu"], params["b_logstd"]], axis=1)
    wcat_p = _pad2(w_cat, h_pad, head_pad).astype(jnp.bfloat16)
    hw_p = jnp.dot(h_p, wcat_p,
                   preferred_element_type=jnp.float32).astype(jnp.bfloat16)
    bcat_p = _pad2(b_cat, 1, head_pad).astype(jnp.float32)

    out = _gcn_aggregate(a_p, hw_p, bcat_p, relu=False, out_dtype=jnp.float32)
    mu = out[:n, :latent]
    logstd = out[:n, latent:2 * latent]
    return mu, logstd


# ----------------------------------------------------------------------------
if __name__ == "__main__":
    key = jax.random.PRNGKey(0)
    k_x, k_e, k_p = jax.random.split(key, 3)

    # Small graph: 16 nodes, 24 directed edges; dims per VariationalGCNEncoder.
    num_nodes = 16
    num_edges = 24
    input_dim, hidden_dim, latent_dim = 32, 32, 16

    x = jax.random.normal(k_x, (num_nodes, input_dim), jnp.float32)
    edge_index = jax.random.randint(k_e, (2, num_edges), 0, num_nodes,
                                    dtype=jnp.int32)

    params = init_vgcn_params(k_p, input_dim, hidden_dim, latent_dim)
    a_hat = build_norm_adj(edge_index, num_nodes)   # "cached=True" equivalent

    mu, logstd = vgcn_encoder_forward(params, x, a_hat)
    mu, logstd = jax.block_until_ready((mu, logstd))

    assert mu.shape == (num_nodes, latent_dim)
    assert logstd.shape == (num_nodes, latent_dim)
    assert mu.dtype == jnp.float32 and logstd.dtype == jnp.float32

    # Plain-JAX reference check (bf16 streaming -> generous tolerance).
    def _ref_gcn(a, xx, w, b):
        return a @ xx @ w + b

    h_ref = jnp.maximum(_ref_gcn(a_hat, x, params["w1"], params["b1"]), 0.0)
    mu_ref = _ref_gcn(a_hat, h_ref, params["w_mu"], params["b_mu"])
    ls_ref = _ref_gcn(a_hat, h_ref, params["w_logstd"], params["b_logstd"])
    assert jnp.allclose(mu, mu_ref, atol=0.2, rtol=0.2)
    assert jnp.allclose(logstd, ls_ref, atol=0.2, rtol=0.2)

    print("KERNEL_OK")
</pallas_src>

<mosaic_0001>
module attributes {stable_mosaic.version = 11 : i64} {
  func.func @_agg_bias_kernel(%arg0: i32, %arg1: i32, %arg2: memref<128x128xbf16, #tpu.memory_space<vmem>>, %arg3: memref<128x128xbf16, #tpu.memory_space<vmem>>, %arg4: memref<1x128xf32, #tpu.memory_space<vmem>>, %arg5: memref<128x128xbf16, #tpu.memory_space<vmem>>, %arg6: memref<128x128xf32, #tpu.memory_space<vmem>>) attributes {dimension_semantics = [#tpu.dimension_semantics<parallel>, #tpu.dimension_semantics<arbitrary>], iteration_bounds = array<i64: 1, 1>, scalar_prefetch = 0 : i64, scratch_operands = 1 : i64, tpu.core_type = #tpu.core_type<tc>, window_params = [{transform_indices = @transform_0, window_bounds = array<i64: 128, 128>}, {transform_indices = @transform_1, window_bounds = array<i64: 128, 128>}, {pipeline_mode = #tpu.pipeline_mode<synchronous>, transform_indices = @transform_2, window_bounds = array<i64: 1, 128>}, {transform_indices = @transform_3, window_bounds = array<i64: 128, 128>}]} {
    %c0_i32 = arith.constant 0 : i32
    %0 = arith.cmpi eq, %arg1, %c0_i32 : i32
    %1 = arith.extui %0 : i1 to i32
    %c0_i32_0 = arith.constant 0 : i32
    %2 = arith.cmpi ne, %1, %c0_i32_0 : i32
    scf.if %2 {
      %cst_10 = arith.constant 0.000000e+00 : f32
      %12 = vector.broadcast %cst_10 : f32 to vector<128x128xf32>
      %c0_11 = arith.constant 0 : index
      %c0_12 = arith.constant 0 : index
      %13 = vector.load %arg6[%c0_11, %c0_12] : memref<128x128xf32, #tpu.memory_space<vmem>>, vector<128x128xf32>
      tpu.vector_store %arg6[%c0_11, %c0_12], %12 {strides = array<i32>} : memref<128x128xf32, #tpu.memory_space<vmem>>, vector<128x128xf32>,
    } else {
    }
    %c0 = arith.constant 0 : index
    %c0_1 = arith.constant 0 : index
    %3 = vector.load %arg6[%c0, %c0_1] : memref<128x128xf32, #tpu.memory_space<vmem>>, vector<128x128xf32>
    %c0_2 = arith.constant 0 : index
    %c0_3 = arith.constant 0 : index
    %4 = vector.load %arg2[%c0_2, %c0_3] : memref<128x128xbf16, #tpu.memory_space<vmem>>, vector<128x128xbf16>
    %c0_4 = arith.constant 0 : index
    %c0_5 = arith.constant 0 : index
    %5 = vector.load %arg3[%c0_4, %c0_5] : memref<128x128xbf16, #tpu.memory_space<vmem>>, vector<128x128xbf16>
    %cst = arith.constant dense<0.000000e+00> : vector<128x128xf32>
    %6 = tpu.matmul %4, %5, %cst {dimension_numbers = #tpu.dot_dimension_numbers<[1], [0], [0], [1], [0, 0, 1, 1], [], []>} : vector<128x128xbf16>, vector<128x128xbf16>, vector<128x128xf32> -> vector<128x128xf32>
    %7 = arith.addf %3, %6 : vector<128x128xf32>
    %c0_6 = arith.constant 0 : index
    %c0_7 = arith.constant 0 : index
    %8 = vector.load %arg6[%c0_6, %c0_7] : memref<128x128xf32, #tpu.memory_space<vmem>>, vector<128x128xf32>
    tpu.vector_store %arg6[%c0_6, %c0_7], %7 {strides = array<i32>} : memref<128x128xf32, #tpu.memory_space<vmem>>, vector<128x128xf32>,
    %c0_i32_8 = arith.constant 0 : i32
    %9 = arith.cmpi eq, %arg1, %c0_i32_8 : i32
    %10 = arith.extui %9 : i1 to i32
    %c0_i32_9 = arith.constant 0 : i32
    %11 = arith.cmpi ne, %10, %c0_i32_9 : i32
    scf.if %11 {
      %c0_10 = arith.constant 0 : index
      %c0_11 = arith.constant 0 : index
      %12 = vector.load %arg6[%c0_10, %c0_11] : memref<128x128xf32, #tpu.memory_space<vmem>>, vector<128x128xf32>
      %c0_12 = arith.constant 0 : index
      %c0_13 = arith.constant 0 : index
      %13 = vector.load %arg4[%c0_12, %c0_13] : memref<1x128xf32, #tpu.memory_space<vmem>>, vector<1x128xf32>
      %14 = vector.broadcast %13 : vector<1x128xf32> to vector<128x128xf32>
      %15 = arith.addf %12, %14 : vector<128x128xf32>
      %cst_14 = arith.constant 0.000000e+00 : f32
      %16 = vector.broadcast %cst_14 : f32 to vector<128x128xf32>
      %17 = arith.maximumf %15, %16 : vector<128x128xf32>
      %18 = arith.truncf %17 : vector<128x128xf32> to vector<128x128xbf16>
      %c0_15 = arith.constant 0 : index
      %c0_16 = arith.constant 0 : index
      %19 = vector.load %arg5[%c0_15, %c0_16] : memref<128x128xbf16, #tpu.memory_space<vmem>>, vector<128x128xbf16>
      tpu.vector_store %arg5[%c0_15, %c0_16], %18 {strides = array<i32>} : memref<128x128xbf16, #tpu.memory_space<vmem>>, vector<128x128xbf16>,
    } else {
    }
    return
  }
  func.func @transform_0(%arg0: i32, %arg1: i32) -> (i32, i32) {
    %c0_i32 = arith.constant 0 : i32
    return %arg0, %arg1 : i32, i32
  }
  func.func @transform_1(%arg0: i32, %arg1: i32) -> (i32, i32) {
    %c0_i32 = arith.constant 0 : i32
    %c0_i32_0 = arith.constant 0 : i32
    return %arg1, %c0_i32 : i32, i32
  }
  func.func @transform_2(%arg0: i32, %arg1: i32) -> (i32, i32) {
    %c0_i32 = arith.constant 0 : i32
    %c0_i32_0 = arith.constant 0 : i32
    %c0_i32_1 = arith.constant 0 : i32
    return %c0_i32, %c0_i32_0 : i32, i32
  }
  func.func @transform_3(%arg0: i32, %arg1: i32) -> (i32, i32) {
    %c0_i32 = arith.constant 0 : i32
    %c0_i32_0 = arith.constant 0 : i32
    return %arg0, %c0_i32 : i32, i32
  }
}

module attributes {stable_mosaic.version = 11 : i64} {
  func.func @_agg_bias_kernel(%arg0: i32, %arg1: i32, %arg2: memref<128x128xbf16, #tpu.memory_space<vmem>>, %arg3: memref<128x128xbf16, #tpu.memory_space<vmem>>, %arg4: memref<1x128xf32, #tpu.memory_space<vmem>>, %arg5: memref<128x128xf32, #tpu.memory_space<vmem>>, %arg6: memref<128x128xf32, #tpu.memory_space<vmem>>) attributes {dimension_semantics = [#tpu.dimension_semantics<parallel>, #tpu.dimension_semantics<arbitrary>], iteration_bounds = array<i64: 1, 1>, scalar_prefetch = 0 : i64, scratch_operands = 1 : i64, tpu.core_type = #tpu.core_type<tc>, window_params = [{transform_indices = @transform_0, window_bounds = array<i64: 128, 128>}, {transform_indices = @transform_1, window_bounds = array<i64: 128, 128>}, {pipeline_mode = #tpu.pipeline_mode<synchronous>, transform_indices = @transform_2, window_bounds = array<i64: 1, 128>}, {transform_indices = @transform_3, window_bounds = array<i64: 128, 128>}]} {
    %c0_i32 = arith.constant 0 : i32
    %0 = arith.cmpi eq, %arg1, %c0_i32 : i32
    %1 = arith.extui %0 : i1 to i32
    %c0_i32_0 = arith.constant 0 : i32
    %2 = arith.cmpi ne, %1, %c0_i32_0 : i32
    scf.if %2 {
      %cst_10 = arith.constant 0.000000e+00 : f32
      %12 = vector.broadcast %cst_10 : f32 to vector<128x128xf32>
      %c0_11 = arith.constant 0 : index
      %c0_12 = arith.constant 0 : index
      %13 = vector.load %arg6[%c0_11, %c0_12] : memref<128x128xf32, #tpu.memory_space<vmem>>, vector<128x128xf32>
      tpu.vector_store %arg6[%c0_11, %c0_12], %12 {strides = array<i32>} : memref<128x128xf32, #tpu.memory_space<vmem>>, vector<128x128xf32>,
    } else {
    }
    %c0 = arith.constant 0 : index
    %c0_1 = arith.constant 0 : index
    %3 = vector.load %arg6[%c0, %c0_1] : memref<128x128xf32, #tpu.memory_space<vmem>>, vector<128x128xf32>
    %c0_2 = arith.constant 0 : index
    %c0_3 = arith.constant 0 : index
    %4 = vector.load %arg2[%c0_2, %c0_3] : memref<128x128xbf16, #tpu.memory_space<vmem>>, vector<128x128xbf16>
    %c0_4 = arith.constant 0 : index
    %c0_5 = arith.constant 0 : index
    %5 = vector.load %arg3[%c0_4, %c0_5] : memref<128x128xbf16, #tpu.memory_space<vmem>>, vector<128x128xbf16>
    %cst = arith.constant dense<0.000000e+00> : vector<128x128xf32>
    %6 = tpu.matmul %4, %5, %cst {dimension_numbers = #tpu.dot_dimension_numbers<[1], [0], [0], [1], [0, 0, 1, 1], [], []>} : vector<128x128xbf16>, vector<128x128xbf16>, vector<128x128xf32> -> vector<128x128xf32>
    %7 = arith.addf %3, %6 : vector<128x128xf32>
    %c0_6 = arith.constant 0 : index
    %c0_7 = arith.constant 0 : index
    %8 = vector.load %arg6[%c0_6, %c0_7] : memref<128x128xf32, #tpu.memory_space<vmem>>, vector<128x128xf32>
    tpu.vector_store %arg6[%c0_6, %c0_7], %7 {strides = array<i32>} : memref<128x128xf32, #tpu.memory_space<vmem>>, vector<128x128xf32>,
    %c0_i32_8 = arith.constant 0 : i32
    %9 = arith.cmpi eq, %arg1, %c0_i32_8 : i32
    %10 = arith.extui %9 : i1 to i32
    %c0_i32_9 = arith.constant 0 : i32
    %11 = arith.cmpi ne, %10, %c0_i32_9 : i32
    scf.if %11 {
      %c0_10 = arith.constant 0 : index
      %c0_11 = arith.constant 0 : index
      %12 = vector.load %arg6[%c0_10, %c0_11] : memref<128x128xf32, #tpu.memory_space<vmem>>, vector<128x128xf32>
      %c0_12 = arith.constant 0 : index
      %c0_13 = arith.constant 0 : index
      %13 = vector.load %arg4[%c0_12, %c0_13] : memref<1x128xf32, #tpu.memory_space<vmem>>, vector<1x128xf32>
      %14 = vector.broadcast %13 : vector<1x128xf32> to vector<128x128xf32>
      %15 = arith.addf %12, %14 : vector<128x128xf32>
      %c0_14 = arith.constant 0 : index
      %c0_15 = arith.constant 0 : index
      %16 = vector.load %arg5[%c0_14, %c0_15] : memref<128x128xf32, #tpu.memory_space<vmem>>, vector<128x128xf32>
      tpu.vector_store %arg5[%c0_14, %c0_15], %15 {strides = array<i32>} : memref<128x128xf32, #tpu.memory_space<vmem>>, vector<128x128xf32>,
    } else {
    }
    return
  }
  func.func @transform_0(%arg0: i32, %arg1: i32) -> (i32, i32) {
    %c0_i32 = arith.constant 0 : i32
    return %arg0, %arg1 : i32, i32
  }
  func.func @transform_1(%arg0: i32, %arg1: i32) -> (i32, i32) {
    %c0_i32 = arith.constant 0 : i32
    %c0_i32_0 = arith.constant 0 : i32
    return %arg1, %c0_i32 : i32, i32
  }
  func.func @transform_2(%arg0: i32, %arg1: i32) -> (i32, i32) {
    %c0_i32 = arith.constant 0 : i32
    %c0_i32_0 = arith.constant 0 : i32
    %c0_i32_1 = arith.constant 0 : i32
    return %c0_i32, %c0_i32_0 : i32, i32
  }
  func.func @transform_3(%arg0: i32, %arg1: i32) -> (i32, i32) {
    %c0_i32 = arith.constant 0 : i32
    %c0_i32_0 = arith.constant 0 : i32
    return %arg0, %c0_i32 : i32, i32
  }
}

</mosaic_0001>

<llo_original>
// kernel: vgcn_encoder_forward.2
$region0: #{vgcn_encoder_forward.2}
  #allocation0 [shape = 'u32[]', space=smem, size = 0x4, offset = 0x4, fixed_abs, tag = 'smem constant byte address 0x4 - core index']
  #allocation1 [shape = 'u32[72,128]{1,0:T(1,128)}', space=vmem, size = 0x9000, scoped, tag = 'internal scratch']
  #allocation2 [shape = 'f32[128,128]{1,0:T(8,128)}', space=vmem, size = 0x10000, scoped, tag = 'scratch operand']
  %s0 = inlined_call_operand.vmem [shape: bf16[128,128], index: 0, kind: input, shape index: {}]
  %s1 = inlined_call_operand.vmem [shape: bf16[128,128], index: 1, kind: input, shape index: {}]
  %s2 = inlined_call_operand.vmem [shape: f32[1,128], index: 2, kind: input, shape index: {}]
  %s3 = inlined_call_operand.vmem [shape: bf16[128,128], index: 3, kind: output, shape index: {}]
  %s4 = sld [smem:[#allocation0]]
  $region30: #{vgcn_encoder_forward.2} parent=0
    _
  %s6 = ssub.s32 1, %s4
  %s7 = scalar_select 0, %s6, %s4
  // Predicated region
  $region2: #{vgcn_encoder_forward.2} parent=0 // pred_check
    _
  $region3: #{vgcn_encoder_forward.2} parent=0 // pred_check_branch
    %9 = sbr.rel (0) target = $region5
  $region4: #{vgcn_encoder_forward.2} parent=0 // pred_region
    _
  $region5: #{vgcn_encoder_forward.2} parent=0 // pred_fallthru
    _
  // Predicated region
  $region6: #{vgcn_encoder_forward.2} parent=0 // pred_check
    _
  $region7: #{vgcn_encoder_forward.2} parent=0 // pred_check_branch
    %11 = sbr.rel (0) target = $region9
  $region8: #{vgcn_encoder_forward.2} parent=0 // pred_region
    _
  $region9: #{vgcn_encoder_forward.2} parent=0 // pred_fallthru
    _
  // Predicated region
  $region10: #{vgcn_encoder_forward.2} parent=0 // pred_check
    _
  $region11: #{vgcn_encoder_forward.2} parent=0 // pred_check_branch
    %13 = sbr.rel (0) target = $region13
  $region12: #{vgcn_encoder_forward.2} parent=0 // pred_region
    _
  $region13: #{vgcn_encoder_forward.2} parent=0 // pred_fallthru
    _
  %p14 = scmp.eq.s32.totalorder 0, 0
  // Predicated region
  $region14: #{vgcn_encoder_forward.2} parent=0 // pred_check
    %p15 = pneg %p14
  $region15: #{vgcn_encoder_forward.2} parent=0 // pred_check_branch
    %17 = sbr.rel (%p15) target = $region17
  $region16: #{vgcn_encoder_forward.2} parent=0 // pred_region
    %18 = vst [vmem:[#allocation2] sm:$0xff] 0.0
    %19 = vst [vmem:[#allocation2 + $0x8] sm:$0xff] 0.0
    %20 = vst [vmem:[#allocation2 + $0x10] sm:$0xff] 0.0
    %21 = vst [vmem:[#allocation2 + $0x18] sm:$0xff] 0.0
    %22 = vst [vmem:[#allocation2 + $0x20] sm:$0xff] 0.0
    %23 = vst [vmem:[#allocation2 + $0x28] sm:$0xff] 0.0
    %24 = vst [vmem:[#allocation2 + $0x30] sm:$0xff] 0.0
    %25 = vst [vmem:[#allocation2 + $0x38] sm:$0xff] 0.0
    %26 = vst [vmem:[#allocation2 + $0x40] sm:$0xff] 0.0
    %27 = vst [vmem:[#allocation2 + $0x48] sm:$0xff] 0.0
    %28 = vst [vmem:[#allocation2 + $0x50] sm:$0xff] 0.0
    %29 = vst [vmem:[#allocation2 + $0x58] sm:$0xff] 0.0
    %30 = vst [vmem:[#allocation2 + $0x60] sm:$0xff] 0.0
    %31 = vst [vmem:[#allocation2 + $0x68] sm:$0xff] 0.0
    %32 = vst [vmem:[#allocation2 + $0x70] sm:$0xff] 0.0
    %33 = vst [vmem:[#allocation2 + $0x78] sm:$0xff] 0.0
  $region17: #{vgcn_encoder_forward.2} parent=0 // pred_fallthru
    _
  %v34 = vld [vmem:[#allocation2] sm:$0xff]
  %v35 = vld [vmem:[#allocation2 + $0x8] sm:$0xff]
  %v36 = vld [vmem:[#allocation2 + $0x10] sm:$0xff]
  %v37 = vld [vmem:[#allocation2 + $0x18] sm:$0xff]
  %v38 = vld [vmem:[#allocation2 + $0x20] sm:$0xff]
  %v39 = vld [vmem:[#allocation2 + $0x28] sm:$0xff]
  %v40 = vld [vmem:[#allocation2 + $0x30] sm:$0xff]
  %v41 = vld [vmem:[#allocation2 + $0x38] sm:$0xff]
  %v42 = vld [vmem:[#allocation2 + $0x40] sm:$0xff]
  %v43 = vld [vmem:[#allocation2 + $0x48] sm:$0xff]
  %v44 = vld [vmem:[#allocation2 + $0x50] sm:$0xff]
  %v45 = vld [vmem:[#allocation2 + $0x58] sm:$0xff]
  %v46 = vld [vmem:[#allocation2 + $0x60] sm:$0xff]
  %v47 = vld [vmem:[#allocation2 + $0x68] sm:$0xff]
  %v48 = vld [vmem:[#allocation2 + $0x70] sm:$0xff]
  %v49 = vld [vmem:[#allocation2 + $0x78] sm:$0xff]
  %v50 = vld [vmem:[%s0] sm:$0xf]
  %v51 = vld [vmem:[%s0 + $0x4] sm:$0xf]
  %v52 = vld [vmem:[%s0 + $0x8] sm:$0xf]
  %v53 = vld [vmem:[%s0 + $0xc] sm:$0xf]
  %v54 = vld [vmem:[%s0 + $0x10] sm:$0xf]
  %v55 = vld [vmem:[%s0 + $0x14] sm:$0xf]
  %v56 = vld [vmem:[%s0 + $0x18] sm:$0xf]
  %v57 = vld [vmem:[%s0 + $0x1c] sm:$0xf]
  %v58 = vld [vmem:[%s0 + $0x20] sm:$0xf]
  %v59 = vld [vmem:[%s0 + $0x24] sm:$0xf]
  %v60 = vld [vmem:[%s0 + $0x28] sm:$0xf]
  %v61 = vld [vmem:[%s0 + $0x2c] sm:$0xf]
  %v62 = vld [vmem:[%s0 + $0x30] sm:$0xf]
  %v63 = vld [vmem:[%s0 + $0x34] sm:$0xf]
  %v64 = vld [vmem:[%s0 + $0x38] sm:$0xf]
  %v65 = vld [vmem:[%s0 + $0x3c] sm:$0xf]
  %v66 = vld [vmem:[%s1] sm:$0xf]
  %v67 = vld [vmem:[%s1 + $0x4] sm:$0xf]
  %v68 = vld [vmem:[%s1 + $0x8] sm:$0xf]
  %v69 = vld [vmem:[%s1 + $0xc] sm:$0xf]
  %v70 = vld [vmem:[%s1 + $0x10] sm:$0xf]
  %v71 = vld [vmem:[%s1 + $0x14] sm:$0xf]
  %v72 = vld [vmem:[%s1 + $0x18] sm:$0xf]
  %v73 = vld [vmem:[%s1 + $0x1c] sm:$0xf]
  %v74 = vld [vmem:[%s1 + $0x20] sm:$0xf]
  %v75 = vld [vmem:[%s1 + $0x24] sm:$0xf]
  %v76 = vld [vmem:[%s1 + $0x28] sm:$0xf]
  %v77 = vld [vmem:[%s1 + $0x2c] sm:$0xf]
  %v78 = vld [vmem:[%s1 + $0x30] sm:$0xf]
  %v79 = vld [vmem:[%s1 + $0x34] sm:$0xf]
  %v80 = vld [vmem:[%s1 + $0x38] sm:$0xf]
  %v81 = vld [vmem:[%s1 + $0x3c] sm:$0xf]
  %v98 = vunpack.c.l.b16 %v50
  %v99 = vunpack.c.l.b16 %v51
  %v100 = vunpack.c.l.b16 %v52
  %v101 = vunpack.c.l.b16 %v53
  %v102 = vunpack.c.l.b16 %v54
  %v103 = vunpack.c.l.b16 %v55
  %v104 = vunpack.c.l.b16 %v56
  %v105 = vunpack.c.l.b16 %v57
  %v106 = vunpack.c.l.b16 %v58
  %v107 = vunpack.c.l.b16 %v59
  %v108 = vunpack.c.l.b16 %v60
  %v109 = vunpack.c.l.b16 %v61
  %v110 = vunpack.c.l.b16 %v62
  %v111 = vunpack.c.l.b16 %v63
  %v112 = vunpack.c.l.b16 %v64
  %v113 = vunpack.c.l.b16 %v65
  %v114 = vpack.c.b16 %v99, %v98
  %v115 = vpack.c.b16 %v101, %v100
  %v116 = vpack.c.b16 %v103, %v102
  %v117 = vpack.c.b16 %v105, %v104
  %v118 = vpack.c.b16 %v107, %v106
  %v119 = vpack.c.b16 %v109, %v108
  %v120 = vpack.c.b16 %v111, %v110
  %v121 = vpack.c.b16 %v113, %v112
  %v146 = vunpack.c.l.b16 %v66
  %v147 = vunpack.c.l.b16 %v67
  %v148 = vunpack.c.l.b16 %v68
  %v149 = vunpack.c.l.b16 %v69
  %v150 = vunpack.c.l.b16 %v70
  %v151 = vunpack.c.l.b16 %v71
  %v152 = vunpack.c.l.b16 %v72
  %v153 = vunpack.c.l.b16 %v73
  %v154 = vunpack.c.l.b16 %v74
  %v155 = vunpack.c.l.b16 %v75
  %v156 = vunpack.c.l.b16 %v76
  %v157 = vunpack.c.l.b16 %v77
  %v158 = vunpack.c.l.b16 %v78
  %v159 = vunpack.c.l.b16 %v79
  %v160 = vunpack.c.l.b16 %v80
  %v161 = vunpack.c.l.b16 %v81
  %v162 = vpack.c.b16 %v147, %v146
  %v163 = vpack.c.b16 %v149, %v148
  %v164 = vpack.c.b16 %v151, %v150
  %v165 = vpack.c.b16 %v153, %v152
  %v166 = vpack.c.b16 %v155, %v154
  %v167 = vpack.c.b16 %v157, %v156
  %v168 = vpack.c.b16 %v159, %v158
  %v169 = vpack.c.b16 %v161, %v160
  %178 = vmatpush.bf16.msra.mxu0 %v169
  %179 = vmatpush.bf16.msra.mxu0 %v168
  %180 = vmatpush.bf16.msra.mxu0 %v167
  %181 = vmatpush.bf16.msra.mxu0 %v166
  %182 = vmatpush.bf16.msra.mxu0 %v165
  %183 = vmatpush.bf16.msra.mxu0 %v164
  %184 = vmatpush.bf16.msra.mxu0 %v163
  %185 = vmatpush.bf16.msra.mxu0 %v162
  %186 = vmatmul.bf16.gmra.mxu0 %v114
  %v187 = vpop.f32.mrf.mxu0
  %v188 = vadd.f32 0.0, %v187
  %v189 = vpop.f32.mrf.mxu0
  %v190 = vadd.f32 0.0, %v189
  %191 = vmatmul.bf16.gmra.mxu0 %v115
  %v192 = vpop.f32.mrf.mxu0
  %v193 = vadd.f32 0.0, %v192
  %v194 = vpop.f32.mrf.mxu0
  %v195 = vadd.f32 0.0, %v194
  %196 = vmatmul.bf16.gmra.mxu0 %v116
  %v197 = vpop.f32.mrf.mxu0
  %v198 = vadd.f32 0.0, %v197
  %v199 = vpop.f32.mrf.mxu0
  %v200 = vadd.f32 0.0, %v199
  %201 = vmatmul.bf16.gmra.mxu0 %v117
  %v202 = vpop.f32.mrf.mxu0
  %v203 = vadd.f32 0.0, %v202
  %v204 = vpop.f32.mrf.mxu0
  %v205 = vadd.f32 0.0, %v204
  %206 = vmatmul.bf16.gmra.mxu0 %v118
  %v207 = vpop.f32.mrf.mxu0
  %v208 = vadd.f32 0.0, %v207
  %v209 = vpop.f32.mrf.mxu0
  %v210 = vadd.f32 0.0, %v209
  %211 = vmatmul.bf16.gmra.mxu0 %v119
  %v212 = vpop.f32.mrf.mxu0
  %v213 = vadd.f32 0.0, %v212
  %v214 = vpop.f32.mrf.mxu0
  %v215 = vadd.f32 0.0, %v214
  %216 = vmatmul.bf16.gmra.mxu0 %v120
  %v217 = vpop.f32.mrf.mxu0
  %v218 = vadd.f32 0.0, %v217
  %v219 = vpop.f32.mrf.mxu0
  %v220 = vadd.f32 0.0, %v219
  %221 = vmatmul.bf16.gmra.mxu0 %v121
  %v222 = vpop.f32.mrf.mxu0
  %v223 = vadd.f32 0.0, %v222
  %v224 = vpop.f32.mrf.mxu0
  %v225 = vadd.f32 0.0, %v224
  %226 = vdwg.mxu0
  %v227 = vadd.f32 %v34, %v188
  %v228 = vadd.f32 %v35, %v190
  %v229 = vadd.f32 %v36, %v193
  %v230 = vadd.f32 %v37, %v195
  %v231 = vadd.f32 %v38, %v198
  %v232 = vadd.f32 %v39, %v200
  %v233 = vadd.f32 %v40, %v203
  %v234 = vadd.f32 %v41, %v205
  %v235 = vadd.f32 %v42, %v208
  %v236 = vadd.f32 %v43, %v210
  %v237 = vadd.f32 %v44, %v213
  %v238 = vadd.f32 %v45, %v215
  %v239 = vadd.f32 %v46, %v218
  %v240 = vadd.f32 %v47, %v220
  %v241 = vadd.f32 %v48, %v223
  %v242 = vadd.f32 %v49, %v225
  %243 = vst [vmem:[#allocation2] sm:$0xff] %v227
  %244 = vst [vmem:[#allocation2 + $0x8] sm:$0xff] %v228
  %245 = vst [vmem:[#allocation2 + $0x10] sm:$0xff] %v229
  %246 = vst [vmem:[#allocation2 + $0x18] sm:$0xff] %v230
  %247 = vst [vmem:[#allocation2 + $0x20] sm:$0xff] %v231
  %248 = vst [vmem:[#allocation2 + $0x28] sm:$0xff] %v232
  %249 = vst [vmem:[#allocation2 + $0x30] sm:$0xff] %v233
  %250 = vst [vmem:[#allocation2 + $0x38] sm:$0xff] %v234
  %251 = vst [vmem:[#allocation2 + $0x40] sm:$0xff] %v235
  %252 = vst [vmem:[#allocation2 + $0x48] sm:$0xff] %v236
  %253 = vst [vmem:[#allocation2 + $0x50] sm:$0xff] %v237
  %254 = vst [vmem:[#allocation2 + $0x58] sm:$0xff] %v238
  %255 = vst [vmem:[#allocation2 + $0x60] sm:$0xff] %v239
  %256 = vst [vmem:[#allocation2 + $0x68] sm:$0xff] %v240
  %257 = vst [vmem:[#allocation2 + $0x70] sm:$0xff] %v241
  %258 = vst [vmem:[#allocation2 + $0x78] sm:$0xff] %v242
  // Predicated region
  $region18: #{vgcn_encoder_forward.2} parent=0 // pred_check
    %p259 = pneg %p14
  $region19: #{vgcn_encoder_forward.2} parent=0 // pred_check_branch
    %261 = sbr.rel (%p259) target = $region21
  $region20: #{vgcn_encoder_forward.2} parent=0 // pred_region
    %v262 = vld [vmem:[#allocation2] sm:$0xff]
    %v263 = vld [vmem:[#allocation2 + $0x8] sm:$0xff]
    %v264 = vld [vmem:[#allocation2 + $0x10] sm:$0xff]
    %v265 = vld [vmem:[#allocation2 + $0x18] sm:$0xff]
    %v266 = vld [vmem:[#allocation2 + $0x20] sm:$0xff]
    %v267 = vld [vmem:[#allocation2 + $0x28] sm:$0xff]
    %v268 = vld [vmem:[#allocation2 + $0x30] sm:$0xff]
    %v269 = vld [vmem:[#allocation2 + $0x38] sm:$0xff]
    %v270 = vld [vmem:[#allocation2 + $0x40] sm:$0xff]
    %v271 = vld [vmem:[#allocation2 + $0x48] sm:$0xff]
    %v272 = vld [vmem:[#allocation2 + $0x50] sm:$0xff]
    %v273 = vld [vmem:[#allocation2 + $0x58] sm:$0xff]
    %v274 = vld [vmem:[#allocation2 + $0x60] sm:$0xff]
    %v275 = vld [vmem:[#allocation2 + $0x68] sm:$0xff]
    %v276 = vld [vmem:[#allocation2 + $0x70] sm:$0xff]
    %v277 = vld [vmem:[#allocation2 + $0x78] sm:$0xff]
    %v278 = vld [vmem:[%s2] sm:$0x1]
    %v280 = vperm.slane %v278, 0
    %v282 = vadd.f32 %v262, %v280
    %v283 = vadd.f32 %v263, %v280
    %v284 = vadd.f32 %v264, %v280
    %v285 = vadd.f32 %v265, %v280
    %v286 = vadd.f32 %v266, %v280
    %v287 = vadd.f32 %v267, %v280
    %v288 = vadd.f32 %v268, %v280
    %v289 = vadd.f32 %v269, %v280
    %v290 = vadd.f32 %v270, %v280
    %v291 = vadd.f32 %v271, %v280
    %v292 = vadd.f32 %v272, %v280
    %v293 = vadd.f32 %v273, %v280
    %v294 = vadd.f32 %v274, %v280
    %v295 = vadd.f32 %v275, %v280
    %v296 = vadd.f32 %v276, %v280
    %v297 = vadd.f32 %v277, %v280
    %v298 = vmax.f32 %v282, 0.0
    %v299 = vmax.f32 %v283, 0.0
    %v300 = vmax.f32 %v284, 0.0
    %v301 = vmax.f32 %v285, 0.0
    %v302 = vmax.f32 %v286, 0.0
    %v303 = vmax.f32 %v287, 0.0
    %v304 = vmax.f32 %v288, 0.0
    %v305 = vmax.f32 %v289, 0.0
    %v306 = vmax.f32 %v290, 0.0
    %v307 = vmax.f32 %v291, 0.0
    %v308 = vmax.f32 %v292, 0.0
    %v309 = vmax.f32 %v293, 0.0
    %v310 = vmax.f32 %v294, 0.0
    %v311 = vmax.f32 %v295, 0.0
    %v312 = vmax.f32 %v296, 0.0
    %v313 = vmax.f32 %v297, 0.0
    %v314 = vpack.c.bf16 %v298, %v298
    %v315 = vpack.c.bf16 %v299, %v299
    %v316 = vpack.c.bf16 %v300, %v300
    %v317 = vpack.c.bf16 %v301, %v301
    %v318 = vpack.c.bf16 %v302, %v302
    %v319 = vpack.c.bf16 %v303, %v303
    %v320 = vpack.c.bf16 %v304, %v304
    %v321 = vpack.c.bf16 %v305, %v305
    %v322 = vpack.c.bf16 %v306, %v306
    %v323 = vpack.c.bf16 %v307, %v307
    %v324 = vpack.c.bf16 %v308, %v308
    %v325 = vpack.c.bf16 %v309, %v309
    %v326 = vpack.c.bf16 %v310, %v310
    %v327 = vpack.c.bf16 %v311, %v311
    %v328 = vpack.c.bf16 %v312, %v312
    %v329 = vpack.c.bf16 %v313, %v313
    %330 = vst [vmem:[%s3] sm:$0xf] %v314
    %331 = vst [vmem:[%s3 + $0x4] sm:$0xf] %v315
    %332 = vst [vmem:[%s3 + $0x8] sm:$0xf] %v316
    %333 = vst [vmem:[%s3 + $0xc] sm:$0xf] %v317
    %334 = vst [vmem:[%s3 + $0x10] sm:$0xf] %v318
    %335 = vst [vmem:[%s3 + $0x14] sm:$0xf] %v319
    %336 = vst [vmem:[%s3 + $0x18] sm:$0xf] %v320
    %337 = vst [vmem:[%s3 + $0x1c] sm:$0xf] %v321
    %338 = vst [vmem:[%s3 + $0x20] sm:$0xf] %v322
    %339 = vst [vmem:[%s3 + $0x24] sm:$0xf] %v323
    %340 = vst [vmem:[%s3 + $0x28] sm:$0xf] %v324
    %341 = vst [vmem:[%s3 + $0x2c] sm:$0xf] %v325
    %342 = vst [vmem:[%s3 + $0x30] sm:$0xf] %v326
    %343 = vst [vmem:[%s3 + $0x34] sm:$0xf] %v327
    %344 = vst [vmem:[%s3 + $0x38] sm:$0xf] %v328
    %345 = vst [vmem:[%s3 + $0x3c] sm:$0xf] %v329
  $region21: #{vgcn_encoder_forward.2} parent=0 // pred_fallthru
    _
  // Predicated region
  $region22: #{vgcn_encoder_forward.2} parent=0 // pred_check
    _
  $region23: #{vgcn_encoder_forward.2} parent=0 // pred_check_branch
    %347 = sbr.rel (0) target = $region25
  $region24: #{vgcn_encoder_forward.2} parent=0 // pred_region
    _
  $region25: #{vgcn_encoder_forward.2} parent=0 // pred_fallthru
    _
  // Predicated region
  $region26: #{vgcn_encoder_forward.2} parent=0 // pred_check
    _
  $region27: #{vgcn_encoder_forward.2} parent=0 // pred_check_branch
    %349 = sbr.rel (0) target = $region29
  $region28: #{vgcn_encoder_forward.2} parent=0 // pred_region
    _
  $region29: #{vgcn_encoder_forward.2} parent=0 // pred_fallthru
    _

// kernel: vgcn_encoder_forward.3
$region0: #{vgcn_encoder_forward.3}
  #allocation0 [shape = 'u32[]', space=smem, size = 0x4, offset = 0x4, fixed_abs, tag = 'smem constant byte address 0x4 - core index']
  #allocation1 [shape = 'u32[72,128]{1,0:T(1,128)}', space=vmem, size = 0x9000, scoped, tag = 'internal scratch']
  #allocation2 [shape = 'f32[128,128]{1,0:T(8,128)}', space=vmem, size = 0x10000, scoped, tag = 'scratch operand']
  %s0 = inlined_call_operand.vmem [shape: bf16[128,128], index: 0, kind: input, shape index: {}]
  %s1 = inlined_call_operand.vmem [shape: bf16[128,128], index: 1, kind: input, shape index: {}]
  %s2 = inlined_call_operand.vmem [shape: f32[1,128], index: 2, kind: input, shape index: {}]
  %s3 = inlined_call_operand.vmem [shape: f32[128,128], index: 3, kind: output, shape index: {}]
  %s4 = sld [smem:[#allocation0]]
  $region30: #{vgcn_encoder_forward.3} parent=0
    _
  %s6 = ssub.s32 1, %s4
  %s7 = scalar_select 0, %s6, %s4
  // Predicated region
  $region2: #{vgcn_encoder_forward.3} parent=0 // pred_check
    _
  $region3: #{vgcn_encoder_forward.3} parent=0 // pred_check_branch
    %9 = sbr.rel (0) target = $region5
  $region4: #{vgcn_encoder_forward.3} parent=0 // pred_region
    _
  $region5: #{vgcn_encoder_forward.3} parent=0 // pred_fallthru
    _
  // Predicated region
  $region6: #{vgcn_encoder_forward.3} parent=0 // pred_check
    _
  $region7: #{vgcn_encoder_forward.3} parent=0 // pred_check_branch
    %11 = sbr.rel (0) target = $region9
  $region8: #{vgcn_encoder_forward.3} parent=0 // pred_region
    _
  $region9: #{vgcn_encoder_forward.3} parent=0 // pred_fallthru
    _
  // Predicated region
  $region10: #{vgcn_encoder_forward.3} parent=0 // pred_check
    _
  $region11: #{vgcn_encoder_forward.3} parent=0 // pred_check_branch
    %13 = sbr.rel (0) target = $region13
  $region12: #{vgcn_encoder_forward.3} parent=0 // pred_region
    _
  $region13: #{vgcn_encoder_forward.3} parent=0 // pred_fallthru
    _
  %p14 = scmp.eq.s32.totalorder 0, 0
  // Predicated region
  $region14: #{vgcn_encoder_forward.3} parent=0 // pred_check
    %p15 = pneg %p14
  $region15: #{vgcn_encoder_forward.3} parent=0 // pred_check_branch
    %17 = sbr.rel (%p15) target = $region17
  $region16: #{vgcn_encoder_forward.3} parent=0 // pred_region
    %18 = vst [vmem:[#allocation2] sm:$0xff] 0.0
    %19 = vst [vmem:[#allocation2 + $0x8] sm:$0xff] 0.0
    %20 = vst [vmem:[#allocation2 + $0x10] sm:$0xff] 0.0
    %21 = vst [vmem:[#allocation2 + $0x18] sm:$0xff] 0.0
    %22 = vst [vmem:[#allocation2 + $0x20] sm:$0xff] 0.0
    %23 = vst [vmem:[#allocation2 + $0x28] sm:$0xff] 0.0
    %24 = vst [vmem:[#allocation2 + $0x30] sm:$0xff] 0.0
    %25 = vst [vmem:[#allocation2 + $0x38] sm:$0xff] 0.0
    %26 = vst [vmem:[#allocation2 + $0x40] sm:$0xff] 0.0
    %27 = vst [vmem:[#allocation2 + $0x48] sm:$0xff] 0.0
    %28 = vst [vmem:[#allocation2 + $0x50] sm:$0xff] 0.0
    %29 = vst [vmem:[#allocation2 + $0x58] sm:$0xff] 0.0
    %30 = vst [vmem:[#allocation2 + $0x60] sm:$0xff] 0.0
    %31 = vst [vmem:[#allocation2 + $0x68] sm:$0xff] 0.0
    %32 = vst [vmem:[#allocation2 + $0x70] sm:$0xff] 0.0
    %33 = vst [vmem:[#allocation2 + $0x78] sm:$0xff] 0.0
  $region17: #{vgcn_encoder_forward.3} parent=0 // pred_fallthru
    _
  %v34 = vld [vmem:[#allocation2] sm:$0xff]
  %v35 = vld [vmem:[#allocation2 + $0x8] sm:$0xff]
  %v36 = vld [vmem:[#allocation2 + $0x10] sm:$0xff]
  %v37 = vld [vmem:[#allocation2 + $0x18] sm:$0xff]
  %v38 = vld [vmem:[#allocation2 + $0x20] sm:$0xff]
  %v39 = vld [vmem:[#allocation2 + $0x28] sm:$0xff]
  %v40 = vld [vmem:[#allocation2 + $0x30] sm:$0xff]
  %v41 = vld [vmem:[#allocation2 + $0x38] sm:$0xff]
  %v42 = vld [vmem:[#allocation2 + $0x40] sm:$0xff]
  %v43 = vld [vmem:[#allocation2 + $0x48] sm:$0xff]
  %v44 = vld [vmem:[#allocation2 + $0x50] sm:$0xff]
  %v45 = vld [vmem:[#allocation2 + $0x58] sm:$0xff]
  %v46 = vld [vmem:[#allocation2 + $0x60] sm:$0xff]
  %v47 = vld [vmem:[#allocation2 + $0x68] sm:$0xff]
  %v48 = vld [vmem:[#allocation2 + $0x70] sm:$0xff]
  %v49 = vld [vmem:[#allocation2 + $0x78] sm:$0xff]
  %v50 = vld [vmem:[%s0] sm:$0xf]
  %v51 = vld [vmem:[%s0 + $0x4] sm:$0xf]
  %v52 = vld [vmem:[%s0 + $0x8] sm:$0xf]
  %v53 = vld [vmem:[%s0 + $0xc] sm:$0xf]
  %v54 = vld [vmem:[%s0 + $0x10] sm:$0xf]
  %v55 = vld [vmem:[%s0 + $0x14] sm:$0xf]
  %v56 = vld [vmem:[%s0 + $0x18] sm:$0xf]
  %v57 = vld [vmem:[%s0 + $0x1c] sm:$0xf]
  %v58 = vld [vmem:[%s0 + $0x20] sm:$0xf]
  %v59 = vld [vmem:[%s0 + $0x24] sm:$0xf]
  %v60 = vld [vmem:[%s0 + $0x28] sm:$0xf]
  %v61 = vld [vmem:[%s0 + $0x2c] sm:$0xf]
  %v62 = vld [vmem:[%s0 + $0x30] sm:$0xf]
  %v63 = vld [vmem:[%s0 + $0x34] sm:$0xf]
  %v64 = vld [vmem:[%s0 + $0x38] sm:$0xf]
  %v65 = vld [vmem:[%s0 + $0x3c] sm:$0xf]
  %v66 = vld [vmem:[%s1] sm:$0xf]
  %v67 = vld [vmem:[%s1 + $0x4] sm:$0xf]
  %v68 = vld [vmem:[%s1 + $0x8] sm:$0xf]
  %v69 = vld [vmem:[%s1 + $0xc] sm:$0xf]
  %v70 = vld [vmem:[%s1 + $0x10] sm:$0xf]
  %v71 = vld [vmem:[%s1 + $0x14] sm:$0xf]
  %v72 = vld [vmem:[%s1 + $0x18] sm:$0xf]
  %v73 = vld [vmem:[%s1 + $0x1c] sm:$0xf]
  %v74 = vld [vmem:[%s1 + $0x20] sm:$0xf]
  %v75 = vld [vmem:[%s1 + $0x24] sm:$0xf]
  %v76 = vld [vmem:[%s1 + $0x28] sm:$0xf]
  %v77 = vld [vmem:[%s1 + $0x2c] sm:$0xf]
  %v78 = vld [vmem:[%s1 + $0x30] sm:$0xf]
  %v79 = vld [vmem:[%s1 + $0x34] sm:$0xf]
  %v80 = vld [vmem:[%s1 + $0x38] sm:$0xf]
  %v81 = vld [vmem:[%s1 + $0x3c] sm:$0xf]
  %v98 = vunpack.c.l.b16 %v50
  %v99 = vunpack.c.l.b16 %v51
  %v100 = vunpack.c.l.b16 %v52
  %v101 = vunpack.c.l.b16 %v53
  %v102 = vunpack.c.l.b16 %v54
  %v103 = vunpack.c.l.b16 %v55
  %v104 = vunpack.c.l.b16 %v56
  %v105 = vunpack.c.l.b16 %v57
  %v106 = vunpack.c.l.b16 %v58
  %v107 = vunpack.c.l.b16 %v59
  %v108 = vunpack.c.l.b16 %v60
  %v109 = vunpack.c.l.b16 %v61
  %v110 = vunpack.c.l.b16 %v62
  %v111 = vunpack.c.l.b16 %v63
  %v112 = vunpack.c.l.b16 %v64
  %v113 = vunpack.c.l.b16 %v65
  %v114 = vpack.c.b16 %v99, %v98
  %v115 = vpack.c.b16 %v101, %v100
  %v116 = vpack.c.b16 %v103, %v102
  %v117 = vpack.c.b16 %v105, %v104
  %v118 = vpack.c.b16 %v107, %v106
  %v119 = vpack.c.b16 %v109, %v108
  %v120 = vpack.c.b16 %v111, %v110
  %v121 = vpack.c.b16 %v113, %v112
  %v146 = vunpack.c.l.b16 %v66
  %v147 = vunpack.c.l.b16 %v67
  %v148 = vunpack.c.l.b16 %v68
  %v149 = vunpack.c.l.b16 %v69
  %v150 = vunpack.c.l.b16 %v70
  %v151 = vunpack.c.l.b16 %v71
  %v152 = vunpack.c.l.b16 %v72
  %v153 = vunpack.c.l.b16 %v73
  %v154 = vunpack.c.l.b16 %v74
  %v155 = vunpack.c.l.b16 %v75
  %v156 = vunpack.c.l.b16 %v76
  %v157 = vunpack.c.l.b16 %v77
  %v158 = vunpack.c.l.b16 %v78
  %v159 = vunpack.c.l.b16 %v79
  %v160 = vunpack.c.l.b16 %v80
  %v161 = vunpack.c.l.b16 %v81
  %v162 = vpack.c.b16 %v147, %v146
  %v163 = vpack.c.b16 %v149, %v148
  %v164 = vpack.c.b16 %v151, %v150
  %v165 = vpack.c.b16 %v153, %v152
  %v166 = vpack.c.b16 %v155, %v154
  %v167 = vpack.c.b16 %v157, %v156
  %v168 = vpack.c.b16 %v159, %v158
  %v169 = vpack.c.b16 %v161, %v160
  %178 = vmatpush.bf16.msra.mxu0 %v169
  %179 = vmatpush.bf16.msra.mxu0 %v168
  %180 = vmatpush.bf16.msra.mxu0 %v167
  %181 = vmatpush.bf16.msra.mxu0 %v166
  %182 = vmatpush.bf16.msra.mxu0 %v165
  %183 = vmatpush.bf16.msra.mxu0 %v164
  %184 = vmatpush.bf16.msra.mxu0 %v163
  %185 = vmatpush.bf16.msra.mxu0 %v162
  %186 = vmatmul.bf16.gmra.mxu0 %v114
  %v187 = vpop.f32.mrf.mxu0
  %v188 = vadd.f32 0.0, %v187
  %v189 = vpop.f32.mrf.mxu0
  %v190 = vadd.f32 0.0, %v189
  %191 = vmatmul.bf16.gmra.mxu0 %v115
  %v192 = vpop.f32.mrf.mxu0
  %v193 = vadd.f32 0.0, %v192
  %v194 = vpop.f32.mrf.mxu0
  %v195 = vadd.f32 0.0, %v194
  %196 = vmatmul.bf16.gmra.mxu0 %v116
  %v197 = vpop.f32.mrf.mxu0
  %v198 = vadd.f32 0.0, %v197
  %v199 = vpop.f32.mrf.mxu0
  %v200 = vadd.f32 0.0, %v199
  %201 = vmatmul.bf16.gmra.mxu0 %v117
  %v202 = vpop.f32.mrf.mxu0
  %v203 = vadd.f32 0.0, %v202
  %v204 = vpop.f32.mrf.mxu0
  %v205 = vadd.f32 0.0, %v204
  %206 = vmatmul.bf16.gmra.mxu0 %v118
  %v207 = vpop.f32.mrf.mxu0
  %v208 = vadd.f32 0.0, %v207
  %v209 = vpop.f32.mrf.mxu0
  %v210 = vadd.f32 0.0, %v209
  %211 = vmatmul.bf16.gmra.mxu0 %v119
  %v212 = vpop.f32.mrf.mxu0
  %v213 = vadd.f32 0.0, %v212
  %v214 = vpop.f32.mrf.mxu0
  %v215 = vadd.f32 0.0, %v214
  %216 = vmatmul.bf16.gmra.mxu0 %v120
  %v217 = vpop.f32.mrf.mxu0
  %v218 = vadd.f32 0.0, %v217
  %v219 = vpop.f32.mrf.mxu0
  %v220 = vadd.f32 0.0, %v219
  %221 = vmatmul.bf16.gmra.mxu0 %v121
  %v222 = vpop.f32.mrf.mxu0
  %v223 = vadd.f32 0.0, %v222
  %v224 = vpop.f32.mrf.mxu0
  %v225 = vadd.f32 0.0, %v224
  %226 = vdwg.mxu0
  %v227 = vadd.f32 %v34, %v188
  %v228 = vadd.f32 %v35, %v190
  %v229 = vadd.f32 %v36, %v193
  %v230 = vadd.f32 %v37, %v195
  %v231 = vadd.f32 %v38, %v198
  %v232 = vadd.f32 %v39, %v200
  %v233 = vadd.f32 %v40, %v203
  %v234 = vadd.f32 %v41, %v205
  %v235 = vadd.f32 %v42, %v208
  %v236 = vadd.f32 %v43, %v210
  %v237 = vadd.f32 %v44, %v213
  %v238 = vadd.f32 %v45, %v215
  %v239 = vadd.f32 %v46, %v218
  %v240 = vadd.f32 %v47, %v220
  %v241 = vadd.f32 %v48, %v223
  %v242 = vadd.f32 %v49, %v225
  %243 = vst [vmem:[#allocation2] sm:$0xff] %v227
  %244 = vst [vmem:[#allocation2 + $0x8] sm:$0xff] %v228
  %245 = vst [vmem:[#allocation2 + $0x10] sm:$0xff] %v229
  %246 = vst [vmem:[#allocation2 + $0x18] sm:$0xff] %v230
  %247 = vst [vmem:[#allocation2 + $0x20] sm:$0xff] %v231
  %248 = vst [vmem:[#allocation2 + $0x28] sm:$0xff] %v232
  %249 = vst [vmem:[#allocation2 + $0x30] sm:$0xff] %v233
  %250 = vst [vmem:[#allocation2 + $0x38] sm:$0xff] %v234
  %251 = vst [vmem:[#allocation2 + $0x40] sm:$0xff] %v235
  %252 = vst [vmem:[#allocation2 + $0x48] sm:$0xff] %v236
  %253 = vst [vmem:[#allocation2 + $0x50] sm:$0xff] %v237
  %254 = vst [vmem:[#allocation2 + $0x58] sm:$0xff] %v238
  %255 = vst [vmem:[#allocation2 + $0x60] sm:$0xff] %v239
  %256 = vst [vmem:[#allocation2 + $0x68] sm:$0xff] %v240
  %257 = vst [vmem:[#allocation2 + $0x70] sm:$0xff] %v241
  %258 = vst [vmem:[#allocation2 + $0x78] sm:$0xff] %v242
  // Predicated region
  $region18: #{vgcn_encoder_forward.3} parent=0 // pred_check
    %p259 = pneg %p14
  $region19: #{vgcn_encoder_forward.3} parent=0 // pred_check_branch
    %261 = sbr.rel (%p259) target = $region21
  $region20: #{vgcn_encoder_forward.3} parent=0 // pred_region
    %v262 = vld [vmem:[#allocation2] sm:$0xff]
    %v263 = vld [vmem:[#allocation2 + $0x8] sm:$0xff]
    %v264 = vld [vmem:[#allocation2 + $0x10] sm:$0xff]
    %v265 = vld [vmem:[#allocation2 + $0x18] sm:$0xff]
    %v266 = vld [vmem:[#allocation2 + $0x20] sm:$0xff]
    %v267 = vld [vmem:[#allocation2 + $0x28] sm:$0xff]
    %v268 = vld [vmem:[#allocation2 + $0x30] sm:$0xff]
    %v269 = vld [vmem:[#allocation2 + $0x38] sm:$0xff]
    %v270 = vld [vmem:[#allocation2 + $0x40] sm:$0xff]
    %v271 = vld [vmem:[#allocation2 + $0x48] sm:$0xff]
    %v272 = vld [vmem:[#allocation2 + $0x50] sm:$0xff]
    %v273 = vld [vmem:[#allocation2 + $0x58] sm:$0xff]
    %v274 = vld [vmem:[#allocation2 + $0x60] sm:$0xff]
    %v275 = vld [vmem:[#allocation2 + $0x68] sm:$0xff]
    %v276 = vld [vmem:[#allocation2 + $0x70] sm:$0xff]
    %v277 = vld [vmem:[#allocation2 + $0x78] sm:$0xff]
    %v278 = vld [vmem:[%s2] sm:$0x1]
    %v280 = vperm.slane %v278, 0
    %v282 = vadd.f32 %v262, %v280
    %v283 = vadd.f32 %v263, %v280
    %v284 = vadd.f32 %v264, %v280
    %v285 = vadd.f32 %v265, %v280
    %v286 = vadd.f32 %v266, %v280
    %v287 = vadd.f32 %v267, %v280
    %v288 = vadd.f32 %v268, %v280
    %v289 = vadd.f32 %v269, %v280
    %v290 = vadd.f32 %v270, %v280
    %v291 = vadd.f32 %v271, %v280
    %v292 = vadd.f32 %v272, %v280
    %v293 = vadd.f32 %v273, %v280
    %v294 = vadd.f32 %v274, %v280
    %v295 = vadd.f32 %v275, %v280
    %v296 = vadd.f32 %v276, %v280
    %v297 = vadd.f32 %v277, %v280
    %298 = vst [vmem:[%s3] sm:$0xff] %v282
    %299 = vst [vmem:[%s3 + $0x8] sm:$0xff] %v283
    %300 = vst [vmem:[%s3 + $0x10] sm:$0xff] %v284
    %301 = vst [vmem:[%s3 + $0x18] sm:$0xff] %v285
    %302 = vst [vmem:[%s3 + $0x20] sm:$0xff] %v286
    %303 = vst [vmem:[%s3 + $0x28] sm:$0xff] %v287
    %304 = vst [vmem:[%s3 + $0x30] sm:$0xff] %v288
    %305 = vst [vmem:[%s3 + $0x38] sm:$0xff] %v289
    %306 = vst [vmem:[%s3 + $0x40] sm:$0xff] %v290
    %307 = vst [vmem:[%s3 + $0x48] sm:$0xff] %v291
    %308 = vst [vmem:[%s3 + $0x50] sm:$0xff] %v292
    %309 = vst [vmem:[%s3 + $0x58] sm:$0xff] %v293
    %310 = vst [vmem:[%s3 + $0x60] sm:$0xff] %v294
    %311 = vst [vmem:[%s3 + $0x68] sm:$0xff] %v295
    %312 = vst [vmem:[%s3 + $0x70] sm:$0xff] %v296
    %313 = vst [vmem:[%s3 + $0x78] sm:$0xff] %v297
  $region21: #{vgcn_encoder_forward.3} parent=0 // pred_fallthru
    _
  // Predicated region
  $region22: #{vgcn_encoder_forward.3} parent=0 // pred_check
    _
  $region23: #{vgcn_encoder_forward.3} parent=0 // pred_check_branch
    %315 = sbr.rel (0) target = $region25
  $region24: #{vgcn_encoder_forward.3} parent=0 // pred_region
    _
  $region25: #{vgcn_encoder_forward.3} parent=0 // pred_fallthru
    _
  // Predicated region
  $region26: #{vgcn_encoder_forward.3} parent=0 // pred_check
    _
  $region27: #{vgcn_encoder_forward.3} parent=0 // pred_check_branch
    %317 = sbr.rel (0) target = $region29
  $region28: #{vgcn_encoder_forward.3} parent=0 // pred_region
    _
  $region29: #{vgcn_encoder_forward.3} parent=0 // pred_fallthru
    _

</llo_original>
